<compile_context>
chip_gen: v5e
topology: v5e:2x2
jax: 0.10.0
libtpu: 0.0.40
codegen_flags: <defaults>
</compile_context>

<pallas_src>
import math
import functools

import jax
import jax.numpy as jnp
from jax.experimental import pallas as pl
from jax.experimental.pallas import tpu as pltpu


_VMEM_LIMIT_BYTES = 32 * 1024 * 1024   # safe on v5e/v6e/v7x


# ---------------------------------------------------------------------------
# exact-erf GELU (Abramowitz & Stegun 7.1.26 polynomial, max abs err ~1.5e-7)
# implemented with exp/abs/where only so it lowers cleanly inside Mosaic.
# ---------------------------------------------------------------------------
def _erf(x):
    a1, a2, a3, a4, a5 = (0.254829592, -0.284496736, 1.421413741,
                          -1.453152027, 1.061405429)
    p = 0.3275911
    ax = jnp.abs(x)
    t = 1.0 / (1.0 + p * ax)
    poly = ((((a5 * t + a4) * t + a3) * t + a2) * t + a1) * t
    y = 1.0 - poly * jnp.exp(-ax * ax)
    return jnp.where(x >= 0.0, y, -y)


def _gelu_exact(x):
    return x * 0.5 * (1.0 + _erf(x * (1.0 / math.sqrt(2.0))))


# ---------------------------------------------------------------------------
# Kernel 1: BertSelfAttention + BertSelfOutput (dense + residual + LayerNorm)
# grid = (batch, head); head axis accumulates the output projection.
# ---------------------------------------------------------------------------
def _attention_kernel(x_ref,       # (1, S, H)        hidden_states (f32)
                      mask_ref,    # (1, 1, 1, S)     additive attention mask
                      wqkv_ref,    # (3, 1, H, hd)    per-head Q/K/V weights (bf16)
                      bqkv_ref,    # (3, 1, 1, hd)    per-head Q/K/V biases  (f32)
                      wo_ref,      # (1, hd, H)       per-head rows of output dense
                      bo_ref,      # (1, H)
                      gamma_ref, beta_ref,   # (1, H) LayerNorm params
                      out_ref,     # (1, S, H)        attention_output
                      acc_ref,     # (S, H) f32 scratch accumulator
                      *, eps, mxu_dtype):
    h = pl.program_id(1)
    nh = pl.num_programs(1)

    @pl.when(h == 0)
    def _():
        acc_ref[...] = jnp.zeros_like(acc_ref)

    x_f32 = x_ref[0]                          # (S, H) f32 (kept for residual)
    x_m = x_f32.astype(mxu_dtype)

    # Per-head Q/K/V projections — no head-split reshape/transpose needed.
    # 1/sqrt(head_size) is already folded into Wq/bq outside the kernel.
    q = jnp.dot(x_m, wqkv_ref[0, 0], preferred_element_type=jnp.float32) + bqkv_ref[0, 0]
    k = jnp.dot(x_m, wqkv_ref[1, 0], preferred_element_type=jnp.float32) + bqkv_ref[1, 0]
    v = jnp.dot(x_m, wqkv_ref[2, 0], preferred_element_type=jnp.float32) + bqkv_ref[2, 0]

    # scores = q @ k^T  (contract head dim of both operands)
    scores = jax.lax.dot_general(
        q.astype(mxu_dtype), k.astype(mxu_dtype),
        (((1,), (1,)), ((), ())), preferred_element_type=jnp.float32)   # (S, S)
    scores = scores + mask_ref[0, 0]          # (1, S) broadcast over queries

    # numerically-stable softmax along keys (f32 math)
    m = jnp.max(scores, axis=-1, keepdims=True)
    e = jnp.exp(scores - m)
    denom = jnp.sum(e, axis=-1, keepdims=True)
    probs = e * pl.reciprocal(denom, approx=True)
    # TODO(synk): attention-prob / hidden-state dropout is identity in eval mode.
    # Note: att_score is not materialized to HBM; BertEncoder's output never uses it.

    ctx = jnp.dot(probs.astype(mxu_dtype), v.astype(mxu_dtype),
                  preferred_element_type=jnp.float32)                   # (S, hd)

    # Accumulate this head's slice of the output dense across the head grid axis.
    acc_ref[...] += jnp.dot(ctx.astype(mxu_dtype), wo_ref[0],
                            preferred_element_type=jnp.float32)         # (S, H)

    @pl.when(h == nh - 1)
    def _():
        y = acc_ref[...] + bo_ref[...] + x_f32           # dense bias + residual
        u = jnp.mean(y, axis=-1, keepdims=True)
        d = y - u
        var = jnp.mean(d * d, axis=-1, keepdims=True)
        normed = d * jax.lax.rsqrt(var + eps)
        out_ref[0] = (gamma_ref[...] * normed + beta_ref[...]).astype(out_ref.dtype)


def _attention_block(x, mask, p, *, num_heads, eps, mxu_dtype):
    B, S, H = x.shape
    hd = H // num_heads
    kernel = functools.partial(_attention_kernel, eps=eps, mxu_dtype=mxu_dtype)
    const2 = lambda b, h: (0, 0)

    grid_spec = pltpu.PrefetchScalarGridSpec(
        num_scalar_prefetch=0,
        grid=(B, num_heads),
        in_specs=[
            pl.BlockSpec((1, S, H), lambda b, h: (b, 0, 0)),           # hidden_states
            pl.BlockSpec((1, 1, 1, S), lambda b, h: (b, 0, 0, 0)),     # mask
            pl.BlockSpec((3, 1, H, hd), lambda b, h: (0, h, 0, 0)),    # Wqkv (per head)
            pl.BlockSpec((3, 1, 1, hd), lambda b, h: (0, h, 0, 0)),    # bqkv (per head)
            pl.BlockSpec((1, hd, H), lambda b, h: (h, 0, 0)),          # Wo rows (per head)
            pl.BlockSpec((1, H), const2),                              # bo
            pl.BlockSpec((1, H), const2),                              # gamma
            pl.BlockSpec((1, H), const2),                              # beta
        ],
        out_specs=pl.BlockSpec((1, S, H), lambda b, h: (b, 0, 0)),
        scratch_shapes=[pltpu.VMEM((S, H), jnp.float32)],
    )

    return pl.pallas_call(
        kernel,
        out_shape=jax.ShapeDtypeStruct((B, S, H), x.dtype),
        grid_spec=grid_spec,
        compiler_params=pltpu.CompilerParams(
            dimension_semantics=("parallel", "arbitrary"),
            vmem_limit_bytes=_VMEM_LIMIT_BYTES),
    )(x, mask, p["wqkv"], p["bqkv"], p["wo_h"],
      p["bo_attn"], p["gamma1"], p["beta1"])


# ---------------------------------------------------------------------------
# Kernel 2: BertIntermediate (dense + gelu) + BertOutput (dense + residual + LN)
# grid = (batch, intermediate_chunk); chunk axis accumulates the second dense.
# ---------------------------------------------------------------------------
def _ffn_kernel(x_ref,      # (1, S, H)   attention_output (f32)
                wi_ref,     # (H, TI)     intermediate dense chunk (bf16)
                bi_ref,     # (1, TI)
                wo_ref,     # (TI, H)     output dense chunk (bf16)
                bo_ref,     # (1, H)
                gamma_ref, beta_ref,   # (1, H)
                out_ref,    # (1, S, H)
                acc_ref,    # (S, H) f32 scratch
                *, eps, mxu_dtype):
    c = pl.program_id(1)
    nc = pl.num_programs(1)

    @pl.when(c == 0)
    def _():
        acc_ref[...] = jnp.zeros_like(acc_ref)

    x_f32 = x_ref[0]
    x_m = x_f32.astype(mxu_dtype)

    h1 = jnp.dot(x_m, wi_ref[...], preferred_element_type=jnp.float32) + bi_ref[...]
    h1 = _gelu_exact(h1)                                   # exact (erf) gelu, f32
    acc_ref[...] += jnp.dot(h1.astype(mxu_dtype), wo_ref[...],
                            preferred_element_type=jnp.float32)

    @pl.when(c == nc - 1)
    def _():
        y = acc_ref[...] + bo_ref[...] + x_f32             # bias + residual
        u = jnp.mean(y, axis=-1, keepdims=True)
        d = y - u
        var = jnp.mean(d * d, axis=-1, keepdims=True)
        normed = d * jax.lax.rsqrt(var + eps)
        out_ref[0] = (gamma_ref[...] * normed + beta_ref[...]).astype(out_ref.dtype)


def _pick_intermediate_chunk(intermediate_size, max_chunk=2048):
    if intermediate_size <= max_chunk:
        return intermediate_size
    for c in range(max_chunk, 127, -128):
        if c % 128 == 0 and intermediate_size % c == 0:
            return c
    return intermediate_size


def _ffn_block(x, p, *, eps, mxu_dtype):
    B, S, H = x.shape
    inter = p["wi_m"].shape[1]
    ti = _pick_intermediate_chunk(inter)
    nc = inter // ti
    kernel = functools.partial(_ffn_kernel, eps=eps, mxu_dtype=mxu_dtype)
    const2 = lambda b, c: (0, 0)

    grid_spec = pltpu.PrefetchScalarGridSpec(
        num_scalar_prefetch=0,
        grid=(B, nc),
        in_specs=[
            pl.BlockSpec((1, S, H), lambda b, c: (b, 0, 0)),   # attention_output
            pl.BlockSpec((H, ti), lambda b, c: (0, c)),        # Wi chunk
            pl.BlockSpec((1, ti), lambda b, c: (0, c)),        # bi chunk
            pl.BlockSpec((ti, H), lambda b, c: (c, 0)),        # Wo chunk
            pl.BlockSpec((1, H), const2),                      # bo
            pl.BlockSpec((1, H), const2),                      # gamma
            pl.BlockSpec((1, H), const2),                      # beta
        ],
        out_specs=pl.BlockSpec((1, S, H), lambda b, c: (b, 0, 0)),
        scratch_shapes=[pltpu.VMEM((S, H), jnp.float32)],
    )

    return pl.pallas_call(
        kernel,
        out_shape=jax.ShapeDtypeStruct((B, S, H), x.dtype),
        grid_spec=grid_spec,
        compiler_params=pltpu.CompilerParams(
            dimension_semantics=("parallel", "arbitrary"),
            vmem_limit_bytes=_VMEM_LIMIT_BYTES),
    )(x, p["wi_m"], p["bi"], p["wo_ffn_m"], p["bo_ffn"], p["gamma2"], p["beta2"])


# ---------------------------------------------------------------------------
# Parameter prep: per-head weight slicing, score-scale folding, bf16 cast.
# (Done once per layer outside the kernels; weights are stored as (in, out).)
# ---------------------------------------------------------------------------
def _prepare_layer(p, *, num_heads, mxu_dtype):
    H = p["wq"].shape[0]
    hd = H // num_heads
    scale = 1.0 / math.sqrt(hd)

    def head_cols(w):            # (H, H) -> (nH, H, hd)
        return w.reshape(H, num_heads, hd).transpose(1, 0, 2)

    def head_bias(b):            # (1, H) -> (nH, 1, hd)
        return b.reshape(num_heads, 1, hd)

    wqkv = jnp.stack([head_cols(p["wq"] * scale),    # fold 1/sqrt(hd) into Wq
                      head_cols(p["wk"]),
                      head_cols(p["wv"])], axis=0).astype(mxu_dtype)     # (3,nH,H,hd)
    bqkv = jnp.stack([head_bias(p["bq"] * scale),
                      head_bias(p["bk"]),
                      head_bias(p["bv"])], axis=0).astype(jnp.float32)   # (3,nH,1,hd)
    wo_h = p["wo_attn"].reshape(num_heads, hd, H).astype(mxu_dtype)      # (nH,hd,H)

    return {
        "wqkv": wqkv, "bqkv": bqkv, "wo_h": wo_h,
        "bo_attn": p["bo_attn"], "gamma1": p["gamma1"], "beta1": p["beta1"],
        "wi_m": p["wi"].astype(mxu_dtype), "bi": p["bi"],
        "wo_ffn_m": p["wo_ffn"].astype(mxu_dtype), "bo_ffn": p["bo_ffn"],
        "gamma2": p["gamma2"], "beta2": p["beta2"],
    }


def bert_encoder(hidden_states, attention_mask, layer_params, *,
                 num_heads, eps=1e-5, mxu_dtype=jnp.bfloat16):
    """BertEncoder.forward (default inference path): returns ([final_hidden], None)."""
    # TODO(synk): tgt_layer/tgt_pos/tmp_score/imp_pos/imp_op hidden-state editing
    # paths are host-side data-dependent indexing; only the default path is implemented.
    B, S, H = hidden_states.shape
    assert H % num_heads == 0
    h = hidden_states
    for p in layer_params:
        prepped = _prepare_layer(p, num_heads=num_heads, mxu_dtype=mxu_dtype)
        attn_out = _attention_block(h, attention_mask, prepped,
                                    num_heads=num_heads, eps=eps, mxu_dtype=mxu_dtype)
        h = _ffn_block(attn_out, prepped, eps=eps, mxu_dtype=mxu_dtype)
    all_encoder_layers = [h]
    ffn_weights = None
    return all_encoder_layers, ffn_weights


# ---------------------------------------------------------------------------
# Plain-JAX f32 reference mirroring the PyTorch forward (eval mode).
# ---------------------------------------------------------------------------
def bert_encoder_reference(hidden_states, attention_mask, layer_params, *,
                           num_heads, eps=1e-5):
    B, S, H = hidden_states.shape
    hd = H // num_heads

    def layer_norm(x, gamma, beta):
        u = jnp.mean(x, axis=-1, keepdims=True)
        s = jnp.mean((x - u) ** 2, axis=-1, keepdims=True)
        return gamma * ((x - u) / jnp.sqrt(s + eps)) + beta

    def gelu(x):
        return x * 0.5 * (1.0 + jax.lax.erf(x / math.sqrt(2.0)))

    h = hidden_states
    for p in layer_params:
        q = h @ p["wq"] + p["bq"]
        k = h @ p["wk"] + p["bk"]
        v = h @ p["wv"] + p["bv"]

        def split(t):
            return t.reshape(B, S, num_heads, hd).transpose(0, 2, 1, 3)

        qh, kh, vh = split(q), split(k), split(v)
        scores = jnp.einsum("bhqd,bhkd->bhqk", qh, kh) / math.sqrt(hd)
        scores = scores + attention_mask
        probs = jax.nn.softmax(scores, axis=-1)
        ctx = jnp.einsum("bhqk,bhkd->bhqd", probs, vh)
        ctx = ctx.transpose(0, 2, 1, 3).reshape(B, S, H)

        attn_out = layer_norm(ctx @ p["wo_attn"] + p["bo_attn"] + h,
                              p["gamma1"], p["beta1"])
        inter = gelu(attn_out @ p["wi"] + p["bi"])
        h = layer_norm(inter @ p["wo_ffn"] + p["bo_ffn"] + attn_out,
                       p["gamma2"], p["beta2"])
    return [h], None


if __name__ == "__main__":
    B, S, H, NH, NL = 2, 8, 32, 4, 2
    INTER = 4 * H

    key = jax.random.PRNGKey(0)
    keys = jax.random.split(key, NL + 2)

    def init_linear(k, d_in, d_out):
        kw, kb = jax.random.split(k)
        w = (0.02 * jax.random.normal(kw, (d_in, d_out))).astype(jnp.float32)
        b = (0.02 * jax.random.normal(kb, (1, d_out))).astype(jnp.float32)
        return w, b

    layer_params = []
    for li in range(NL):
        ks = jax.random.split(keys[li], 10)
        wq, bq = init_linear(ks[0], H, H)
        wk, bk = init_linear(ks[1], H, H)
        wv, bv = init_linear(ks[2], H, H)
        wo_a, bo_a = init_linear(ks[3], H, H)
        wi, bi = init_linear(ks[4], H, INTER)
        wo_f, bo_f = init_linear(ks[5], INTER, H)
        gamma1 = (1.0 + 0.1 * jax.random.normal(ks[6], (1, H))).astype(jnp.float32)
        beta1 = (0.1 * jax.random.normal(ks[7], (1, H))).astype(jnp.float32)
        gamma2 = (1.0 + 0.1 * jax.random.normal(ks[8], (1, H))).astype(jnp.float32)
        beta2 = (0.1 * jax.random.normal(ks[9], (1, H))).astype(jnp.float32)
        layer_params.append(dict(
            wq=wq, bq=bq, wk=wk, bk=bk, wv=wv, bv=bv,
            wo_attn=wo_a, bo_attn=bo_a, gamma1=gamma1, beta1=beta1,
            wi=wi, bi=bi, wo_ffn=wo_f, bo_ffn=bo_f, gamma2=gamma2, beta2=beta2))

    hidden_states = jax.random.normal(keys[NL], (B, S, H), dtype=jnp.float32)
    # standard BERT additive mask: 0 for attended positions, -10000 for masked
    keep = (jax.random.uniform(keys[NL + 1], (B, S)) > 0.2).astype(jnp.float32)
    attention_mask = ((1.0 - keep) * -10000.0).reshape(B, 1, 1, S)

    out_layers, ffn_weights = bert_encoder(
        hidden_states, attention_mask, layer_params, num_heads=NH)
    out = jax.block_until_ready(out_layers[0])

    ref_layers, ref_ffn = bert_encoder_reference(
        hidden_states, attention_mask, layer_params, num_heads=NH)
    ref = ref_layers[0]

    assert out.shape == (B, S, H)
    assert ffn_weights is None and ref_ffn is None
    # bf16 MXU operands (f32 accumulation) + approx softmax reciprocal -> loose tol
    max_err = float(jnp.max(jnp.abs(out - ref)))
    assert jnp.allclose(out, ref, atol=2e-2, rtol=2e-2), f"max abs err {max_err}"

    print("KERNEL_OK")
</pallas_src>

<mosaic_0001>
module attributes {stable_mosaic.version = 11 : i64} {
  func.func @_attention_kernel(%arg0: i32, %arg1: i32, %arg2: memref<1x8x32xf32, #tpu.memory_space<vmem>>, %arg3: memref<1x1x1x8xf32, #tpu.memory_space<vmem>>, %arg4: memref<3x1x32x8xbf16, #tpu.memory_space<vmem>>, %arg5: memref<3x1x1x8xf32, #tpu.memory_space<vmem>>, %arg6: memref<1x8x32xbf16, #tpu.memory_space<vmem>>, %arg7: memref<1x32xf32, #tpu.memory_space<vmem>>, %arg8: memref<1x32xf32, #tpu.memory_space<vmem>>, %arg9: memref<1x32xf32, #tpu.memory_space<vmem>>, %arg10: memref<1x8x32xf32, #tpu.memory_space<vmem>>, %arg11: memref<8x32xf32, #tpu.memory_space<vmem>>) attributes {dimension_semantics = [#tpu.dimension_semantics<parallel>, #tpu.dimension_semantics<arbitrary>], iteration_bounds = array<i64: 2, 4>, scalar_prefetch = 0 : i64, scratch_operands = 1 : i64, tpu.core_type = #tpu.core_type<tc>, window_params = [{transform_indices = @transform_0, window_bounds = array<i64: 1, 8, 32>}, {transform_indices = @transform_1, window_bounds = array<i64: 1, 1, 1, 8>}, {transform_indices = @transform_2, window_bounds = array<i64: 3, 1, 32, 8>}, {transform_indices = @transform_3, window_bounds = array<i64: 3, 1, 1, 8>}, {transform_indices = @transform_4, window_bounds = array<i64: 1, 8, 32>}, {pipeline_mode = #tpu.pipeline_mode<synchronous>, transform_indices = @transform_5, window_bounds = array<i64: 1, 32>}, {pipeline_mode = #tpu.pipeline_mode<synchronous>, transform_indices = @transform_6, window_bounds = array<i64: 1, 32>}, {pipeline_mode = #tpu.pipeline_mode<synchronous>, transform_indices = @transform_7, window_bounds = array<i64: 1, 32>}, {transform_indices = @transform_8, window_bounds = array<i64: 1, 8, 32>}]} {
    %c0_i32 = arith.constant 0 : i32
    %0 = arith.cmpi eq, %arg1, %c0_i32 : i32
    %1 = arith.extui %0 : i1 to i32
    %c0_i32_0 = arith.constant 0 : i32
    %2 = arith.cmpi ne, %1, %c0_i32_0 : i32
    scf.if %2 {
      %cst_44 = arith.constant 0.000000e+00 : f32
      %57 = vector.broadcast %cst_44 : f32 to vector<8x32xf32>
      %c0_45 = arith.constant 0 : index
      %c0_46 = arith.constant 0 : index
      %58 = vector.load %arg11[%c0_45, %c0_46] : memref<8x32xf32, #tpu.memory_space<vmem>>, vector<8x32xf32>
      tpu.vector_store %arg11[%c0_45, %c0_46], %57 {strides = array<i32>} : memref<8x32xf32, #tpu.memory_space<vmem>>, vector<8x32xf32>,
    } else {
    }
    %c0 = arith.constant 0 : index
    %c0_1 = arith.constant 0 : index
    %c0_2 = arith.constant 0 : index
    %3 = vector.load %arg2[%c0, %c0_1, %c0_2] : memref<1x8x32xf32, #tpu.memory_space<vmem>>, vector<1x8x32xf32>
    %4 = vector.shape_cast %3 : vector<1x8x32xf32> to vector<8x32xf32>
    %5 = arith.truncf %4 : vector<8x32xf32> to vector<8x32xbf16>
    %c0_3 = arith.constant 0 : index
    %c0_4 = arith.constant 0 : index
    %c0_5 = arith.constant 0 : index
    %c0_6 = arith.constant 0 : index
    %6 = vector.load %arg4[%c0_3, %c0_4, %c0_5, %c0_6] : memref<3x1x32x8xbf16, #tpu.memory_space<vmem>>, vector<1x1x32x8xbf16>
    %7 = vector.shape_cast %6 : vector<1x1x32x8xbf16> to vector<32x8xbf16>
    %cst = arith.constant dense<0.000000e+00> : vector<8x8xf32>
    %8 = tpu.matmul %5, %7, %cst {dimension_numbers = #tpu.dot_dimension_numbers<[1], [0], [0], [1], [0, 0, 1, 1], [], []>} : vector<8x32xbf16>, vector<32x8xbf16>, vector<8x8xf32> -> vector<8x8xf32>
    %c0_7 = arith.constant 0 : index
    %c0_8 = arith.constant 0 : index
    %c0_9 = arith.constant 0 : index
    %c0_10 = arith.constant 0 : index
    %9 = vector.load %arg5[%c0_7, %c0_8, %c0_9, %c0_10] : memref<3x1x1x8xf32, #tpu.memory_space<vmem>>, vector<1x1x1x8xf32>
    %10 = vector.shape_cast %9 : vector<1x1x1x8xf32> to vector<1x8xf32>
    %11 = vector.broadcast %10 : vector<1x8xf32> to vector<8x8xf32>
    %12 = arith.addf %8, %11 : vector<8x8xf32>
    %c1 = arith.constant 1 : index
    %c0_11 = arith.constant 0 : index
    %c0_12 = arith.constant 0 : index
    %c0_13 = arith.constant 0 : index
    %13 = vector.load %arg4[%c1, %c0_11, %c0_12, %c0_13] : memref<3x1x32x8xbf16, #tpu.memory_space<vmem>>, vector<1x1x32x8xbf16>
    %14 = vector.shape_cast %13 : vector<1x1x32x8xbf16> to vector<32x8xbf16>
    %cst_14 = arith.constant dense<0.000000e+00> : vector<8x8xf32>
    %15 = tpu.matmul %5, %14, %cst_14 {dimension_numbers = #tpu.dot_dimension_numbers<[1], [0], [0], [1], [0, 0, 1, 1], [], []>} : vector<8x32xbf16>, vector<32x8xbf16>, vector<8x8xf32> -> vector<8x8xf32>
    %c1_15 = arith.constant 1 : index
    %c0_16 = arith.constant 0 : index
    %c0_17 = arith.constant 0 : index
    %c0_18 = arith.constant 0 : index
    %16 = vector.load %arg5[%c1_15, %c0_16, %c0_17, %c0_18] : memref<3x1x1x8xf32, #tpu.memory_space<vmem>>, vector<1x1x1x8xf32>
    %17 = vector.shape_cast %16 : vector<1x1x1x8xf32> to vector<1x8xf32>
    %18 = vector.broadcast %17 : vector<1x8xf32> to vector<8x8xf32>
    %19 = arith.addf %15, %18 : vector<8x8xf32>
    %c2 = arith.constant 2 : index
    %c0_19 = arith.constant 0 : index
    %c0_20 = arith.constant 0 : index
    %c0_21 = arith.constant 0 : index
    %20 = vector.load %arg4[%c2, %c0_19, %c0_20, %c0_21] : memref<3x1x32x8xbf16, #tpu.memory_space<vmem>>, vector<1x1x32x8xbf16>
    %21 = vector.shape_cast %20 : vector<1x1x32x8xbf16> to vector<32x8xbf16>
    %cst_22 = arith.constant dense<0.000000e+00> : vector<8x8xf32>
    %22 = tpu.matmul %5, %21, %cst_22 {dimension_numbers = #tpu.dot_dimension_numbers<[1], [0], [0], [1], [0, 0, 1, 1], [], []>} : vector<8x32xbf16>, vector<32x8xbf16>, vector<8x8xf32> -> vector<8x8xf32>
    %c2_23 = arith.constant 2 : index
    %c0_24 = arith.constant 0 : index
    %c0_25 = arith.constant 0 : index
    %c0_26 = arith.constant 0 : index
    %23 = vector.load %arg5[%c2_23, %c0_24, %c0_25, %c0_26] : memref<3x1x1x8xf32, #tpu.memory_space<vmem>>, vector<1x1x1x8xf32>
    %24 = vector.shape_cast %23 : vector<1x1x1x8xf32> to vector<1x8xf32>
    %25 = vector.broadcast %24 : vector<1x8xf32> to vector<8x8xf32>
    %26 = arith.addf %22, %25 : vector<8x8xf32>
    %27 = arith.truncf %12 : vector<8x8xf32> to vector<8x8xbf16>
    %28 = arith.truncf %19 : vector<8x8xf32> to vector<8x8xbf16>
    %cst_27 = arith.constant dense<0.000000e+00> : vector<8x8xf32>
    %29 = tpu.matmul %27, %28, %cst_27 {dimension_numbers = #tpu.dot_dimension_numbers<[1], [1], [0], [0], [0, 0, 1, 0], [], []>} : vector<8x8xbf16>, vector<8x8xbf16>, vector<8x8xf32> -> vector<8x8xf32>
    %c0_28 = arith.constant 0 : index
    %c0_29 = arith.constant 0 : index
    %c0_30 = arith.constant 0 : index
    %c0_31 = arith.constant 0 : index
    %30 = vector.load %arg3[%c0_28, %c0_29, %c0_30, %c0_31] : memref<1x1x1x8xf32, #tpu.memory_space<vmem>>, vector<1x1x1x8xf32>
    %31 = vector.shape_cast %30 : vector<1x1x1x8xf32> to vector<1x8xf32>
    %32 = vector.broadcast %31 : vector<1x8xf32> to vector<8x8xf32>
    %33 = arith.addf %29, %32 : vector<8x8xf32>
    %cst_32 = arith.constant dense<0xFF800000> : vector<8xf32>
    %34 = vector.multi_reduction <maximumf>, %33, %cst_32 [1] : vector<8x8xf32> to vector<8xf32>
    %35 = vector.shape_cast %34 : vector<8xf32> to vector<8x1xf32>
    %36 = vector.broadcast %35 : vector<8x1xf32> to vector<8x8xf32>
    %37 = arith.subf %33, %36 : vector<8x8xf32>
    %38 = math.exp %37 : vector<8x8xf32>
    %cst_33 = arith.constant dense<0.000000e+00> : vector<8xf32>
    %39 = vector.multi_reduction <add>, %38, %cst_33 [1] : vector<8x8xf32> to vector<8xf32>
    %40 = vector.shape_cast %39 : vector<8xf32> to vector<8x1xf32>
    %41 = tpu.reciprocal %40 {approx = true} : vector<8x1xf32> -> vector<8x1xf32>
    %42 = vector.broadcast %41 : vector<8x1xf32> to vector<8x8xf32>
    %43 = arith.mulf %38, %42 : vector<8x8xf32>
    %44 = arith.truncf %43 : vector<8x8xf32> to vector<8x8xbf16>
    %45 = arith.truncf %26 : vector<8x8xf32> to vector<8x8xbf16>
    %cst_34 = arith.constant dense<0.000000e+00> : vector<8x8xf32>
    %46 = tpu.matmul %44, %45, %cst_34 {dimension_numbers = #tpu.dot_dimension_numbers<[1], [0], [0], [1], [0, 0, 1, 1], [], []>} : vector<8x8xbf16>, vector<8x8xbf16>, vector<8x8xf32> -> vector<8x8xf32>
    %c0_35 = arith.constant 0 : index
    %c0_36 = arith.constant 0 : index
    %47 = vector.load %arg11[%c0_35, %c0_36] : memref<8x32xf32, #tpu.memory_space<vmem>>, vector<8x32xf32>
    %48 = arith.truncf %46 : vector<8x8xf32> to vector<8x8xbf16>
    %c0_37 = arith.constant 0 : index
    %c0_38 = arith.constant 0 : index
    %c0_39 = arith.constant 0 : index
    %49 = vector.load %arg6[%c0_37, %c0_38, %c0_39] : memref<1x8x32xbf16, #tpu.memory_space<vmem>>, vector<1x8x32xbf16>
    %50 = vector.shape_cast %49 : vector<1x8x32xbf16> to vector<8x32xbf16>
    %cst_40 = arith.constant dense<0.000000e+00> : vector<8x32xf32>
    %51 = tpu.matmul %48, %50, %cst_40 {dimension_numbers = #tpu.dot_dimension_numbers<[1], [0], [0], [1], [0, 0, 1, 1], [], []>} : vector<8x8xbf16>, vector<8x32xbf16>, vector<8x32xf32> -> vector<8x32xf32>
    %52 = arith.addf %47, %51 : vector<8x32xf32>
    %c0_41 = arith.constant 0 : index
    %c0_42 = arith.constant 0 : index
    %53 = vector.load %arg11[%c0_41, %c0_42] : memref<8x32xf32, #tpu.memory_space<vmem>>, vector<8x32xf32>
    tpu.vector_store %arg11[%c0_41, %c0_42], %52 {strides = array<i32>} : memref<8x32xf32, #tpu.memory_space<vmem>>, vector<8x32xf32>,
    %c3_i32 = arith.constant 3 : i32
    %54 = arith.cmpi eq, %arg1, %c3_i32 : i32
    %55 = arith.extui %54 : i1 to i32
    %c0_i32_43 = arith.constant 0 : i32
    %56 = arith.cmpi ne, %55, %c0_i32_43 : i32
    scf.if %56 {
      %c0_44 = arith.constant 0 : index
      %c0_45 = arith.constant 0 : index
      %57 = vector.load %arg11[%c0_44, %c0_45] : memref<8x32xf32, #tpu.memory_space<vmem>>, vector<8x32xf32>
      %c0_46 = arith.constant 0 : index
      %c0_47 = arith.constant 0 : index
      %58 = vector.load %arg7[%c0_46, %c0_47] : memref<1x32xf32, #tpu.memory_space<vmem>>, vector<1x32xf32>
      %59 = vector.broadcast %58 : vector<1x32xf32> to vector<8x32xf32>
      %60 = arith.addf %57, %59 : vector<8x32xf32>
      %61 = arith.addf %60, %4 : vector<8x32xf32>
      %cst_48 = arith.constant dense<0.000000e+00> : vector<8xf32>
      %62 = vector.multi_reduction <add>, %61, %cst_48 [1] : vector<8x32xf32> to vector<8xf32>
      %63 = vector.shape_cast %62 : vector<8xf32> to vector<8x1xf32>
      %cst_49 = arith.constant 3.200000e+01 : f32
      %64 = vector.broadcast %cst_49 : f32 to vector<8x1xf32>
      %65 = arith.divf %63, %64 : vector<8x1xf32>
      %66 = vector.broadcast %65 : vector<8x1xf32> to vector<8x32xf32>
      %67 = arith.subf %61, %66 : vector<8x32xf32>
      %68 = arith.mulf %67, %67 : vector<8x32xf32>
      %cst_50 = arith.constant dense<0.000000e+00> : vector<8xf32>
      %69 = vector.multi_reduction <add>, %68, %cst_50 [1] : vector<8x32xf32> to vector<8xf32>
      %70 = vector.shape_cast %69 : vector<8xf32> to vector<8x1xf32>
      %cst_51 = arith.constant 3.200000e+01 : f32
      %71 = vector.broadcast %cst_51 : f32 to vector<8x1xf32>
      %72 = arith.divf %70, %71 : vector<8x1xf32>
      %cst_52 = arith.constant 9.99999974E-6 : f32
      %73 = vector.broadcast %cst_52 : f32 to vector<8x1xf32>
      %74 = arith.addf %72, %73 : vector<8x1xf32>
      %75 = math.rsqrt %74 : vector<8x1xf32>
      %76 = vector.broadcast %75 : vector<8x1xf32> to vector<8x32xf32>
      %77 = arith.mulf %67, %76 : vector<8x32xf32>
      %c0_53 = arith.constant 0 : index
      %c0_54 = arith.constant 0 : index
      %78 = vector.load %arg8[%c0_53, %c0_54] : memref<1x32xf32, #tpu.memory_space<vmem>>, vector<1x32xf32>
      %79 = vector.broadcast %78 : vector<1x32xf32> to vector<8x32xf32>
      %80 = arith.mulf %79, %77 : vector<8x32xf32>
      %c0_55 = arith.constant 0 : index
      %c0_56 = arith.constant 0 : index
      %81 = vector.load %arg9[%c0_55, %c0_56] : memref<1x32xf32, #tpu.memory_space<vmem>>, vector<1x32xf32>
      %82 = vector.broadcast %81 : vector<1x32xf32> to vector<8x32xf32>
      %83 = arith.addf %80, %82 : vector<8x32xf32>
      %c0_57 = arith.constant 0 : index
      %c0_58 = arith.constant 0 : index
      %c0_59 = arith.constant 0 : index
      %84 = vector.load %arg10[%c0_57, %c0_58, %c0_59] : memref<1x8x32xf32, #tpu.memory_space<vmem>>, vector<1x8x32xf32>
      %85 = vector.shape_cast %84 : vector<1x8x32xf32> to vector<8x32xf32>
      %86 = vector.shape_cast %83 : vector<8x32xf32> to vector<1x8x32xf32>
      tpu.vector_store %arg10[%c0_57, %c0_58, %c0_59], %86 {strides = array<i32>} : memref<1x8x32xf32, #tpu.memory_space<vmem>>, vector<1x8x32xf32>,
    } else {
    }
    return
  }
  func.func @transform_0(%arg0: i32, %arg1: i32) -> (i32, i32, i32) {
    %c0_i32 = arith.constant 0 : i32
    %c0_i32_0 = arith.constant 0 : i32
    %c0_i32_1 = arith.constant 0 : i32
    return %arg0, %c0_i32, %c0_i32_0 : i32, i32, i32
  }
  func.func @transform_1(%arg0: i32, %arg1: i32) -> (i32, i32, i32, i32) {
    %c0_i32 = arith.constant 0 : i32
    %c0_i32_0 = arith.constant 0 : i32
    %c0_i32_1 = arith.constant 0 : i32
    %c0_i32_2 = arith.constant 0 : i32
    return %arg0, %c0_i32, %c0_i32_0, %c0_i32_1 : i32, i32, i32, i32
  }
  func.func @transform_2(%arg0: i32, %arg1: i32) -> (i32, i32, i32, i32) {
    %c0_i32 = arith.constant 0 : i32
    %c0_i32_0 = arith.constant 0 : i32
    %c0_i32_1 = arith.constant 0 : i32
    %c0_i32_2 = arith.constant 0 : i32
    return %c0_i32, %arg1, %c0_i32_0, %c0_i32_1 : i32, i32, i32, i32
  }
  func.func @transform_3(%arg0: i32, %arg1: i32) -> (i32, i32, i32, i32) {
    %c0_i32 = arith.constant 0 : i32
    %c0_i32_0 = arith.constant 0 : i32
    %c0_i32_1 = arith.constant 0 : i32
    %c0_i32_2 = arith.constant 0 : i32
    return %c0_i32, %arg1, %c0_i32_0, %c0_i32_1 : i32, i32, i32, i32
  }
  func.func @transform_4(%arg0: i32, %arg1: i32) -> (i32, i32, i32) {
    %c0_i32 = arith.constant 0 : i32
    %c0_i32_0 = arith.constant 0 : i32
    %c0_i32_1 = arith.constant 0 : i32
    return %arg1, %c0_i32, %c0_i32_0 : i32, i32, i32
  }
  func.func @transform_5(%arg0: i32, %arg1: i32) -> (i32, i32) {
    %c0_i32 = arith.constant 0 : i32
    %c0_i32_0 = arith.constant 0 : i32
    %c0_i32_1 = arith.constant 0 : i32
    return %c0_i32, %c0_i32_0 : i32, i32
  }
  func.func @transform_6(%arg0: i32, %arg1: i32) -> (i32, i32) {
    %c0_i32 = arith.constant 0 : i32
    %c0_i32_0 = arith.constant 0 : i32
    %c0_i32_1 = arith.constant 0 : i32
    return %c0_i32, %c0_i32_0 : i32, i32
  }
  func.func @transform_7(%arg0: i32, %arg1: i32) -> (i32, i32) {
    %c0_i32 = arith.constant 0 : i32
    %c0_i32_0 = arith.constant 0 : i32
    %c0_i32_1 = arith.constant 0 : i32
    return %c0_i32, %c0_i32_0 : i32, i32
  }
  func.func @transform_8(%arg0: i32, %arg1: i32) -> (i32, i32, i32) {
    %c0_i32 = arith.constant 0 : i32
    %c0_i32_0 = arith.constant 0 : i32
    %c0_i32_1 = arith.constant 0 : i32
    return %arg0, %c0_i32, %c0_i32_0 : i32, i32, i32
  }
}

</mosaic_0001>

<llo_original>
// kernel: tpu_custom_call.1
$region0: #{tpu_custom_call.1}
  #allocation0 [shape = 'u32[]', space=smem, size = 0x4, offset = 0x4, fixed_abs, tag = 'smem constant byte address 0x4 - core index']
  #allocation1 [shape = 'u32[72,128]{1,0:T(1,128)}', space=vmem, size = 0x9000, scoped, tag = 'internal scratch']
  #allocation2 [shape = 'f32[8,32]{1,0:T(8,128)}', space=vmem, size = 0x1000, scoped, tag = 'scratch operand']
  %s0 = inlined_call_operand.vmem [shape: f32[2,8,32], index: 0, kind: input, shape index: {}]
  %s1 = inlined_call_operand.vmem [shape: f32[2,1,1,8], index: 1, kind: input, shape index: {}]
  %s2 = inlined_call_operand.vmem [shape: bf16[3,4,32,8], index: 2, kind: input, shape index: {}]
  %s3 = inlined_call_operand.vmem [shape: f32[3,4,1,8], index: 3, kind: input, shape index: {}]
  %s4 = inlined_call_operand.vmem [shape: bf16[4,8,32], index: 4, kind: input, shape index: {}]
  %s5 = inlined_call_operand.vmem [shape: f32[1,32], index: 5, kind: input, shape index: {}]
  %s6 = inlined_call_operand.vmem [shape: f32[1,32], index: 6, kind: input, shape index: {}]
  %s7 = inlined_call_operand.vmem [shape: f32[1,32], index: 7, kind: input, shape index: {}]
  %s8 = inlined_call_operand.hbm [shape: f32[2,8,32], index: 8, kind: output, shape index: {}]
  %s9 = sld [smem:[#allocation0]]
  $region148: #{tpu_custom_call.1} parent=0
    _
  %s11 = ssub.s32 1, %s9
  %s12 = scalar_select 0, %s11, %s9
  $region1: #{tpu_custom_call.1} parent=0
    #allocation3 [shape = 'u8[49152]{0}', space=vmem, size = 0xc000, scoped, tag = 'input window, operand 2']
    #allocation4 [shape = 'u8[3072]{0}', space=vmem, size = 0xc00, scoped, tag = 'input window, operand 3']
    #allocation5 [shape = 'u8[8192]{0}', space=vmem, size = 0x2000, scoped, tag = 'output window, operand 0']
    #allocation6 [shape = 's32[2]{0}', space=sflag, size = 0x8, scoped, tag = 'scoped memory for tpu_custom_call.1']
    %13 = vsyncpa [#allocation6], 0
    %s14 = scalar_lea.sflag [#allocation6], 1
    %15 = vsyncpa %s14, 0
    loop: start=0, step=1, limit=10
    $region2: #{tpu_custom_call.1} parent=1 // loop_pre_header
      _
    $region3: #{tpu_custom_call.1} parent=1 // loop_header
      %s17 = sphi 0, %s21
      %p18 = scmp.ge.s32.totalorder %s17, 10
      %s24 = sphi 0, %s36
      %s25 = sphi 0, %s32
      %s26 = sphi 0, %s24
      %s27 = sphi 0, %s25
      %s28 = sphi 0, %s26
      %s29 = sphi 0, %s27
      %s39 = sphi 0, %s41
      %s42 = sphi 0, %s39
      %s43 = sphi 0, %s42
      %s59 = sphi 0, %s43
      %s65 = sphi 0, %s67
      %s68 = sphi 0, %s65
      %s69 = sphi 0, %s68
      %s85 = sphi 0, %s69
      %s91 = sphi 0, %s93
      %s94 = sphi 0, %s91
      %s95 = sphi 0, %s94
      %s111 = sphi 0, %s95
      %s117 = sphi 0, %s119
      %s120 = sphi 0, %s117
      %s121 = sphi 0, %s120
      %s137 = sphi 0, %s121
      %s143 = sphi 0, %s145
      %s146 = sphi 0, %s143
      %s147 = sphi 0, %s146
      %s163 = sphi 0, %s147
      %s167 = sphi 0, %s167
      %s169 = sphi 0, %s167
      %s170 = sphi 0, %s169
      %s184 = sphi 0, %s170
      %s188 = sphi 0, %s188
      %s190 = sphi 0, %s188
      %s191 = sphi 0, %s190
      %s205 = sphi 0, %s191
      %s209 = sphi 0, %s209
      %s211 = sphi 0, %s209
      %s212 = sphi 0, %s211
      %s226 = sphi 0, %s212
      %s232 = sphi 0, %s234
      %s235 = sphi 0, %s232
      %s236 = sphi 0, %s235
      %s252 = sphi 0, %s236
    $region4: #{tpu_custom_call.1} parent=1 // loop_header_branch
      %20 = sbr.rel (%p18) target = $region8
    $region5: #{tpu_custom_call.1} parent=1 // loop_body
      %s22 = ssub.s32 %s17, 1
      %s23 = ssub.s32 %s17, 2
      %s30 = sadd.s32 1, %s25
      %p31 = scmp.ge.s32.totalorder %s30, 4
      %s32 = scalar_select %p31, 0, %s30
      %s33 = sadd.s32 1, %s24
      %s34 = scalar_select %p31, %s33, %s24
      %p35 = scmp.ge.s32.totalorder %s34, 2
      %s36 = scalar_select %p35, 0, %s34
      %s37 = ssub.s32 %s24, %s36
      %p38 = scmp.eq.s32.totalorder %s37, 0
      %s40 = sadd.s32 %s39, 1
      %s41 = scalar_select %p38, %s39, %s40
      %p44 = pneg %p38
      %p45 = scmp.eq.s32.totalorder %s17, 7
      %p46 = por %p44, %p45
      %p47 = scmp.ne.s32.totalorder %s39, %s42
      %p48 = scmp.eq.s32.totalorder %s17, 0
      %p49 = por %p47, %p48
      %p50 = scmp.ne.s32.totalorder %s39, %s42
      %p51 = scmp.eq.s32.totalorder %s22, 7
      %p52 = por %p50, %p51
      %p53 = scmp.ne.s32.totalorder %s42, %s43
      %p54 = scmp.eq.s32.totalorder %s22, 0
      %p55 = por %p53, %p54
      %p56 = scmp.ne.s32.totalorder %s42, %s43
      %p57 = scmp.eq.s32.totalorder %s23, 7
      %p58 = por %p56, %p57
      %p60 = scmp.ne.s32.totalorder %s43, %s59
      %p61 = scmp.eq.s32.totalorder %s23, 0
      %p62 = por %p60, %p61
      %s63 = ssub.s32 %s24, %s36
      %p64 = scmp.eq.s32.totalorder %s63, 0
      %s66 = sadd.s32 %s65, 1
      %s67 = scalar_select %p64, %s65, %s66
      %p70 = pneg %p64
      %p71 = scmp.eq.s32.totalorder %s17, 7
      %p72 = por %p70, %p71
      %p73 = scmp.ne.s32.totalorder %s65, %s68
      %p74 = scmp.eq.s32.totalorder %s17, 0
      %p75 = por %p73, %p74
      %p76 = scmp.ne.s32.totalorder %s65, %s68
      %p77 = scmp.eq.s32.totalorder %s22, 7
      %p78 = por %p76, %p77
      %p79 = scmp.ne.s32.totalorder %s68, %s69
      %p80 = scmp.eq.s32.totalorder %s22, 0
      %p81 = por %p79, %p80
      %p82 = scmp.ne.s32.totalorder %s68, %s69
      %p83 = scmp.eq.s32.totalorder %s23, 7
      %p84 = por %p82, %p83
      %p86 = scmp.ne.s32.totalorder %s69, %s85
      %p87 = scmp.eq.s32.totalorder %s23, 0
      %p88 = por %p86, %p87
      %s89 = ssub.s32 %s25, %s32
      %p90 = scmp.eq.s32.totalorder %s89, 0
      %s92 = sadd.s32 %s91, 1
      %s93 = scalar_select %p90, %s91, %s92
      %p96 = pneg %p90
      %p97 = scmp.eq.s32.totalorder %s17, 7
      %p98 = por %p96, %p97
      %p99 = scmp.ne.s32.totalorder %s91, %s94
      %p100 = scmp.eq.s32.totalorder %s17, 0
      %p101 = por %p99, %p100
      %p102 = scmp.ne.s32.totalorder %s91, %s94
      %p103 = scmp.eq.s32.totalorder %s22, 7
      %p104 = por %p102, %p103
      %p105 = scmp.ne.s32.totalorder %s94, %s95
      %p106 = scmp.eq.s32.totalorder %s22, 0
      %p107 = por %p105, %p106
      %p108 = scmp.ne.s32.totalorder %s94, %s95
      %p109 = scmp.eq.s32.totalorder %s23, 7
      %p110 = por %p108, %p109
      %p112 = scmp.ne.s32.totalorder %s95, %s111
      %p113 = scmp.eq.s32.totalorder %s23, 0
      %p114 = por %p112, %p113
      %s115 = ssub.s32 %s25, %s32
      %p116 = scmp.eq.s32.totalorder %s115, 0
      %s118 = sadd.s32 %s117, 1
      %s119 = scalar_select %p116, %s117, %s118
      %p122 = pneg %p116
      %p123 = scmp.eq.s32.totalorder %s17, 7
      %p124 = por %p122, %p123
      %p125 = scmp.ne.s32.totalorder %s117, %s120
      %p126 = scmp.eq.s32.totalorder %s17, 0
      %p127 = por %p125, %p126
      %p128 = scmp.ne.s32.totalorder %s117, %s120
      %p129 = scmp.eq.s32.totalorder %s22, 7
      %p130 = por %p128, %p129
      %p131 = scmp.ne.s32.totalorder %s120, %s121
      %p132 = scmp.eq.s32.totalorder %s22, 0
      %p133 = por %p131, %p132
      %p134 = scmp.ne.s32.totalorder %s120, %s121
      %p135 = scmp.eq.s32.totalorder %s23, 7
      %p136 = por %p134, %p135
      %p138 = scmp.ne.s32.totalorder %s121, %s137
      %p139 = scmp.eq.s32.totalorder %s23, 0
      %p140 = por %p138, %p139
      %s141 = ssub.s32 %s25, %s32
      %p142 = scmp.eq.s32.totalorder %s141, 0
      %s144 = sadd.s32 %s143, 1
      %s145 = scalar_select %p142, %s143, %s144
      %p148 = pneg %p142
      %p149 = scmp.eq.s32.totalorder %s17, 7
      %p150 = por %p148, %p149
      %p151 = scmp.ne.s32.totalorder %s143, %s146
      %p152 = scmp.eq.s32.totalorder %s17, 0
      %p153 = por %p151, %p152
      %p154 = scmp.ne.s32.totalorder %s143, %s146
      %p155 = scmp.eq.s32.totalorder %s22, 7
      %p156 = por %p154, %p155
      %p157 = scmp.ne.s32.totalorder %s146, %s147
      %p158 = scmp.eq.s32.totalorder %s22, 0
      %p159 = por %p157, %p158
      %p160 = scmp.ne.s32.totalorder %s146, %s147
      %p161 = scmp.eq.s32.totalorder %s23, 7
      %p162 = por %p160, %p161
      %p164 = scmp.ne.s32.totalorder %s147, %s163
      %p165 = scmp.eq.s32.totalorder %s23, 0
      %p166 = por %p164, %p165
      %s168 = sadd.s32 %s167, 1
      %p171 = scmp.eq.s32.totalorder %s17, 7
      %p172 = scmp.ne.s32.totalorder %s167, %s169
      %p173 = scmp.eq.s32.totalorder %s17, 0
      %p174 = por %p172, %p173
      %p175 = scmp.ne.s32.totalorder %s167, %s169
      %p176 = scmp.eq.s32.totalorder %s22, 7
      %p177 = por %p175, %p176
      %p178 = scmp.ne.s32.totalorder %s169, %s170
      %p179 = scmp.eq.s32.totalorder %s22, 0
      %p180 = por %p178, %p179
      %p181 = scmp.ne.s32.totalorder %s169, %s170
      %p182 = scmp.eq.s32.totalorder %s23, 7
      %p183 = por %p181, %p182
      %p185 = scmp.ne.s32.totalorder %s170, %s184
      %p186 = scmp.eq.s32.totalorder %s23, 0
      %p187 = por %p185, %p186
      %s189 = sadd.s32 %s188, 1
      %p192 = scmp.eq.s32.totalorder %s17, 7
      %p193 = scmp.ne.s32.totalorder %s188, %s190
      %p194 = scmp.eq.s32.totalorder %s17, 0
      %p195 = por %p193, %p194
      %p196 = scmp.ne.s32.totalorder %s188, %s190
      %p197 = scmp.eq.s32.totalorder %s22, 7
      %p198 = por %p196, %p197
      %p199 = scmp.ne.s32.totalorder %s190, %s191
      %p200 = scmp.eq.s32.totalorder %s22, 0
      %p201 = por %p199, %p200
      %p202 = scmp.ne.s32.totalorder %s190, %s191
      %p203 = scmp.eq.s32.totalorder %s23, 7
      %p204 = por %p202, %p203
      %p206 = scmp.ne.s32.totalorder %s191, %s205
      %p207 = scmp.eq.s32.totalorder %s23, 0
      %p208 = por %p206, %p207
      %s210 = sadd.s32 %s209, 1
      %p213 = scmp.eq.s32.totalorder %s17, 7
      %p214 = scmp.ne.s32.totalorder %s209, %s211
      %p215 = scmp.eq.s32.totalorder %s17, 0
      %p216 = por %p214, %p215
      %p217 = scmp.ne.s32.totalorder %s209, %s211
      %p218 = scmp.eq.s32.totalorder %s22, 7
      %p219 = por %p217, %p218
      %p220 = scmp.ne.s32.totalorder %s211, %s212
      %p221 = scmp.eq.s32.totalorder %s22, 0
      %p222 = por %p220, %p221
      %p223 = scmp.ne.s32.totalorder %s211, %s212
      %p224 = scmp.eq.s32.totalorder %s23, 7
      %p225 = por %p223, %p224
      %p227 = scmp.ne.s32.totalorder %s212, %s226
      %p228 = scmp.eq.s32.totalorder %s23, 0
      %p229 = por %p227, %p228
      %s230 = ssub.s32 %s24, %s36
      %p231 = scmp.eq.s32.totalorder %s230, 0
      %s233 = sadd.s32 %s232, 1
      %s234 = scalar_select %p231, %s232, %s233
      %p237 = pneg %p231
      %p238 = scmp.eq.s32.totalorder %s17, 7
      %p239 = por %p237, %p238
      %p240 = scmp.ne.s32.totalorder %s232, %s235
      %p241 = scmp.eq.s32.totalorder %s17, 0
      %p242 = por %p240, %p241
      %p243 = scmp.ne.s32.totalorder %s232, %s235
      %p244 = scmp.eq.s32.totalorder %s22, 7
      %p245 = por %p243, %p244
      %p246 = scmp.ne.s32.totalorder %s235, %s236
      %p247 = scmp.eq.s32.totalorder %s22, 0
      %p248 = por %p246, %p247
      %p249 = scmp.ne.s32.totalorder %s235, %s236
      %p250 = scmp.eq.s32.totalorder %s23, 7
      %p251 = por %p249, %p250
      %p253 = scmp.ne.s32.totalorder %s236, %s252
      %p254 = scmp.eq.s32.totalorder %s23, 0
      %p255 = por %p253, %p254
      %p256 = scmp.le.s32.totalorder 1, %s17
      %p257 = scmp.lt.s32.totalorder %s17, 9
      %p258 = pnand %p256, %p257
      %p259 = pneg %p258
      // Predicated region
      $region9: #{tpu_custom_call.1} parent=5 // pred_check
        _
      $region10: #{tpu_custom_call.1} parent=5 // pred_check_branch
        %261 = sbr.rel (%p258) target = $region12
      $region11: #{tpu_custom_call.1} parent=5 // pred_region
        %s262 = ssub.s32 %s17, 1
        // Predicated region
        $region13: #{tpu_custom_call.1} parent=11 // pred_check
          %p263 = pneg %p180
        $region14: #{tpu_custom_call.1} parent=11 // pred_check_branch
          %265 = sbr.rel (%p263) target = $region16
        $region15: #{tpu_custom_call.1} parent=11 // pred_region
          _
        $region16: #{tpu_custom_call.1} parent=11 // pred_fallthru
          _
        // Predicated region
        $region17: #{tpu_custom_call.1} parent=11 // pred_check
          %p266 = pneg %p201
        $region18: #{tpu_custom_call.1} parent=11 // pred_check_branch
          %268 = sbr.rel (%p266) target = $region20
        $region19: #{tpu_custom_call.1} parent=11 // pred_region
          _
        $region20: #{tpu_custom_call.1} parent=11 // pred_fallthru
          _
        // Predicated region
        $region21: #{tpu_custom_call.1} parent=11 // pred_check
          %p269 = pneg %p222
        $region22: #{tpu_custom_call.1} parent=11 // pred_check_branch
          %271 = sbr.rel (%p269) target = $region24
        $region23: #{tpu_custom_call.1} parent=11 // pred_region
          _
        $region24: #{tpu_custom_call.1} parent=11 // pred_fallthru
          _
      $region12: #{tpu_custom_call.1} parent=5 // pred_fallthru
        _
      %p272 = scmp.lt.s32.totalorder %s17, 8
      // Predicated region
      $region25: #{tpu_custom_call.1} parent=5 // pred_check
        %p273 = pneg %p272
      $region26: #{tpu_custom_call.1} parent=5 // pred_check_branch
        %275 = sbr.rel (%p273) target = $region28
      $region27: #{tpu_custom_call.1} parent=5 // pred_region
        // Predicated region
        $region29: #{tpu_custom_call.1} parent=27 // pred_check
          %p276 = pneg %p49
        $region30: #{tpu_custom_call.1} parent=27 // pred_check_branch
          %278 = sbr.rel (%p276) target = $region32
        $region31: #{tpu_custom_call.1} parent=27 // pred_region
          %p279 = scmp.lt.s32.totalorder %s24, 1
          %s280 = scalar_select %p279, %s24, 1
          %s281 = smul.addr %s280, 8
          %s282 = scalar_lea.vmem %s0, %s281
        $region32: #{tpu_custom_call.1} parent=27 // pred_fallthru
          _
        // Predicated region
        $region33: #{tpu_custom_call.1} parent=27 // pred_check
          %p283 = pneg %p75
        $region34: #{tpu_custom_call.1} parent=27 // pred_check_branch
          %285 = sbr.rel (%p283) target = $region36
        $region35: #{tpu_custom_call.1} parent=27 // pred_region
          %p286 = scmp.lt.s32.totalorder %s24, 1
          %s287 = scalar_select %p286, %s24, 1
          %s288 = scalar_lea.vmem %s1, %s287
        $region36: #{tpu_custom_call.1} parent=27 // pred_fallthru
          _
        // Predicated region
        $region37: #{tpu_custom_call.1} parent=27 // pred_check
          %p289 = pneg %p101
        $region38: #{tpu_custom_call.1} parent=27 // pred_check_branch
          %291 = sbr.rel (%p289) target = $region40
        $region39: #{tpu_custom_call.1} parent=27 // pred_region
          %s292 = sand.u32 %s91, 1
          %s293 = sand.u32 %s91, 1
          %s294 = smul.addr %s293, 48
          %s295 = scalar_lea.vmem [#allocation3], %s294
          %s296 = smul.addr %s25, 4
          %s297 = smul.addr %s296, 4
          %s298 = scalar_lea.vmem %s2, %s297
          // Predicated region
          $region41: #{tpu_custom_call.1} parent=39 // pred_check
            _
          $region42: #{tpu_custom_call.1} parent=39 // pred_check_branch
            %300 = sbr.rel (0) target = $region44
          $region43: #{tpu_custom_call.1} parent=39 // pred_region
            // Predicated region
            $region45: #{tpu_custom_call.1} parent=43 // pred_check
              _
            $region46: #{tpu_custom_call.1} parent=43 // pred_check_branch
              %302 = sbr.rel target = $region48
            $region47: #{tpu_custom_call.1} parent=43 // pred_region
              // Predicated region
              $region60: #{tpu_custom_call.1} parent=47 // pred_check
                _
              $region61: #{tpu_custom_call.1} parent=47 // pred_check_branch
                %340 = sbr.rel (0) target = $region63
              $region62: #{tpu_custom_call.1} parent=47 // pred_region
                loop: start=0, step=1, limit=1
                $region64: #{tpu_custom_call.1} parent=62 // loop_pre_header
                  _
                $region65: #{tpu_custom_call.1} parent=62 // loop_header
                  %s342 = sphi 0, %s346
                  %p343 = scmp.ge.s32.totalorder %s342, 1
                  %s347 = sphi %s298, %s298
                  %s348 = sphi %s295, %s295
                $region66: #{tpu_custom_call.1} parent=62 // loop_header_branch
                  %345 = sbr.rel (%p343) target = $region70
                $region67: #{tpu_custom_call.1} parent=62 // loop_body
                  _
                $region68: #{tpu_custom_call.1} parent=62 // loop_footer
                  %s346 = sadd.s32 1, %s342
                $region69: #{tpu_custom_call.1} parent=62 // loop_footer_branch
                  %341 = sbr.rel target = $region65
                $region70: #{tpu_custom_call.1} parent=62 // loop_exit
                  _
                %s350 = ssub.s32 16, 1
                loop: start=0, step=1, limit=1
                $region71: #{tpu_custom_call.1} parent=62 // loop_pre_header
                  _
                $region72: #{tpu_custom_call.1} parent=62 // loop_header
                  %s352 = sphi 0, %s356
                  %p353 = scmp.ge.s32.totalorder %s352, 1
                  %s357 = sphi %s298, %s298
                  %s358 = sphi %s295, %s295
                $region73: #{tpu_custom_call.1} parent=62 // loop_header_branch
                  %355 = sbr.rel (%p353) target = $region77
                $region74: #{tpu_custom_call.1} parent=62 // loop_body
                  %v359 = vld [vmem:[%s357] sm:%s350]
                  %360 = vst [vmem:[%s358] sm:%s350] %v359
                  %v361 = vld [vmem:[%s357 + $0x4] sm:%s350]
                  %362 = vst [vmem:[%s358 + $0x4] sm:%s350] %v361
                  %v363 = vld [vmem:[%s357 + $0x8] sm:%s350]
                  %364 = vst [vmem:[%s358 + $0x8] sm:%s350] %v363
                  %v365 = vld [vmem:[%s357 + $0xc] sm:%s350]
                  %366 = vst [vmem:[%s358 + $0xc] sm:%s350] %v365
                  %v367 = vld [vmem:[%s357 + $0x40] sm:%s350]
                  %368 = vst [vmem:[%s358 + $0x10] sm:%s350] %v367
                  %v369 = vld [vmem:[%s357 + $0x44] sm:%s350]
                  %370 = vst [vmem:[%s358 + $0x14] sm:%s350] %v369
                  %v371 = vld [vmem:[%s357 + $0x48] sm:%s350]
                  %372 = vst [vmem:[%s358 + $0x18] sm:%s350] %v371
                  %v373 = vld [vmem:[%s357 + $0x4c] sm:%s350]
                  %374 = vst [vmem:[%s358 + $0x1c] sm:%s350] %v373
                  %v375 = vld [vmem:[%s357 + $0x80] sm:%s350]
                  %376 = vst [vmem:[%s358 + $0x20] sm:%s350] %v375
                  %v377 = vld [vmem:[%s357 + $0x84] sm:%s350]
                  %378 = vst [vmem:[%s358 + $0x24] sm:%s350] %v377
                  %v379 = vld [vmem:[%s357 + $0x88] sm:%s350]
                  %380 = vst [vmem:[%s358 + $0x28] sm:%s350] %v379
                  %v381 = vld [vmem:[%s357 + $0x8c] sm:%s350]
                  %382 = vst [vmem:[%s358 + $0x2c] sm:%s350] %v381
                $region75: #{tpu_custom_call.1} parent=62 // loop_footer
                  %s356 = sadd.s32 1, %s352
                $region76: #{tpu_custom_call.1} parent=62 // loop_footer_branch
                  %351 = sbr.rel target = $region72
                $region77: #{tpu_custom_call.1} parent=62 // loop_exit
                  _
              $region63: #{tpu_custom_call.1} parent=47 // pred_fallthru
                _
            $region48: #{tpu_custom_call.1} parent=43 // pred_fallthru
              _
            // Predicated region
            $region49: #{tpu_custom_call.1} parent=43 // pred_check
              _
            $region50: #{tpu_custom_call.1} parent=43 // pred_check_branch
              %304 = sbr.rel (0) target = $region52
            $region51: #{tpu_custom_call.1} parent=43 // pred_region
              %s306 = ssub.s32 16, 1
              loop: start=0, step=1, limit=1
              $region53: #{tpu_custom_call.1} parent=51 // loop_pre_header
                _
              $region54: #{tpu_custom_call.1} parent=51 // loop_header
                %s308 = sphi 0, %s312
                %p309 = scmp.ge.s32.totalorder %s308, 1
                %s313 = sphi %s298, %s298
                %s314 = sphi %s295, %s295
              $region55: #{tpu_custom_call.1} parent=51 // loop_header_branch
                %311 = sbr.rel (%p309) target = $region59
              $region56: #{tpu_custom_call.1} parent=51 // loop_body
                %v315 = vld [vmem:[%s313] sm:%s306]
                %316 = vst [vmem:[%s314] sm:%s306] %v315
                %v317 = vld [vmem:[%s313 + $0x4] sm:%s306]
                %318 = vst [vmem:[%s314 + $0x4] sm:%s306] %v317
                %v319 = vld [vmem:[%s313 + $0x8] sm:%s306]
                %320 = vst [vmem:[%s314 + $0x8] sm:%s306] %v319
                %v321 = vld [vmem:[%s313 + $0xc] sm:%s306]
                %322 = vst [vmem:[%s314 + $0xc] sm:%s306] %v321
                %v323 = vld [vmem:[%s313 + $0x40] sm:%s306]
                %324 = vst [vmem:[%s314 + $0x10] sm:%s306] %v323
                %v325 = vld [vmem:[%s313 + $0x44] sm:%s306]
                %326 = vst [vmem:[%s314 + $0x14] sm:%s306] %v325
                %v327 = vld [vmem:[%s313 + $0x48] sm:%s306]
                %328 = vst [vmem:[%s314 + $0x18] sm:%s306] %v327
                %v329 = vld [vmem:[%s313 + $0x4c] sm:%s306]
                %330 = vst [vmem:[%s314 + $0x1c] sm:%s306] %v329
                %v331 = vld [vmem:[%s313 + $0x80] sm:%s306]
                %332 = vst [vmem:[%s314 + $0x20] sm:%s306] %v331
                %v333 = vld [vmem:[%s313 + $0x84] sm:%s306]
                %334 = vst [vmem:[%s314 + $0x24] sm:%s306] %v333
                %v335 = vld [vmem:[%s313 + $0x88] sm:%s306]
                %336 = vst [vmem:[%s314 + $0x28] sm:%s306] %v335
                %v337 = vld [vmem:[%s313 + $0x8c] sm:%s306]
                %338 = vst [vmem:[%s314 + $0x2c] sm:%s306] %v337
              $region57: #{tpu_custom_call.1} parent=51 // loop_footer
                %s312 = sadd.s32 1, %s308
              $region58: #{tpu_custom_call.1} parent=51 // loop_footer_branch
                %307 = sbr.rel target = $region54
              $region59: #{tpu_custom_call.1} parent=51 // loop_exit
                _
            $region52: #{tpu_custom_call.1} parent=43 // pred_fallthru
              _
          $region44: #{tpu_custom_call.1} parent=39 // pred_fallthru
            _
          %383 = vnop
        $region40: #{tpu_custom_call.1} parent=27 // pred_fallthru
          _
        // Predicated region
        $region78: #{tpu_custom_call.1} parent=27 // pred_check
          %p384 = pneg %p127
        $region79: #{tpu_custom_call.1} parent=27 // pred_check_branch
          %386 = sbr.rel (%p384) target = $region81
        $region80: #{tpu_custom_call.1} parent=27 // pred_region
          %s387 = sand.u32 %s117, 1
          %s388 = sand.u32 %s117, 1
          %s389 = smul.addr %s388, 3
          %s390 = scalar_lea.vmem [#allocation4], %s389
          %s391 = scalar_lea.vmem %s3, %s25
          // Predicated region
          $region82: #{tpu_custom_call.1} parent=80 // pred_check
            _
          $region83: #{tpu_custom_call.1} parent=80 // pred_check_branch
            %393 = sbr.rel (0) target = $region85
          $region84: #{tpu_custom_call.1} parent=80 // pred_region
            // Predicated region
            $region86: #{tpu_custom_call.1} parent=84 // pred_check
              _
            $region87: #{tpu_custom_call.1} parent=84 // pred_check_branch
              %395 = sbr.rel target = $region89
            $region88: #{tpu_custom_call.1} parent=84 // pred_region
              // Predicated region
              $region101: #{tpu_custom_call.1} parent=88 // pred_check
                _
              $region102: #{tpu_custom_call.1} parent=88 // pred_check_branch
                %415 = sbr.rel (0) target = $region104
              $region103: #{tpu_custom_call.1} parent=88 // pred_region
                %s417 = ssub.s32 2, 1
                loop: start=0, step=1, limit=1
                $region105: #{tpu_custom_call.1} parent=103 // loop_pre_header
                  _
                $region106: #{tpu_custom_call.1} parent=103 // loop_header
                  %s419 = sphi 0, %s423
                  %p420 = scmp.ge.s32.totalorder %s419, 1
                  %s424 = sphi %s391, %s391
                  %s425 = sphi %s390, %s390
                $region107: #{tpu_custom_call.1} parent=103 // loop_header_branch
                  %422 = sbr.rel (%p420) target = $region111
                $region108: #{tpu_custom_call.1} parent=103 // loop_body
                  %v426 = vld [vmem:[%s424] sm:%s417]
                  %427 = vst [vmem:[%s425] sm:%s417] %v426
                  %v428 = vld [vmem:[%s424 + $0x4] sm:%s417]
                  %429 = vst [vmem:[%s425 + $0x1] sm:%s417] %v428
                  %v430 = vld [vmem:[%s424 + $0x8] sm:%s417]
                  %431 = vst [vmem:[%s425 + $0x2] sm:%s417] %v430
                $region109: #{tpu_custom_call.1} parent=103 // loop_footer
                  %s423 = sadd.s32 1, %s419
                $region110: #{tpu_custom_call.1} parent=103 // loop_footer_branch
                  %418 = sbr.rel target = $region106
                $region111: #{tpu_custom_call.1} parent=103 // loop_exit
                  _
              $region104: #{tpu_custom_call.1} parent=88 // pred_fallthru
                _
            $region89: #{tpu_custom_call.1} parent=84 // pred_fallthru
              _
            // Predicated region
            $region90: #{tpu_custom_call.1} parent=84 // pred_check
              _
            $region91: #{tpu_custom_call.1} parent=84 // pred_check_branch
              %397 = sbr.rel (0) target = $region93
            $region92: #{tpu_custom_call.1} parent=84 // pred_region
              %s399 = ssub.s32 2, 1
              loop: start=0, step=1, limit=1
              $region94: #{tpu_custom_call.1} parent=92 // loop_pre_header
                _
              $region95: #{tpu_custom_call.1} parent=92 // loop_header
                %s401 = sphi 0, %s405
                %p402 = scmp.ge.s32.totalorder %s401, 1
                %s406 = sphi %s391, %s391
                %s407 = sphi %s390, %s390
              $region96: #{tpu_custom_call.1} parent=92 // loop_header_branch
                %404 = sbr.rel (%p402) target = $region100
              $region97: #{tpu_custom_call.1} parent=92 // loop_body
                %v408 = vld [vmem:[%s406] sm:%s399]
                %409 = vst [vmem:[%s407] sm:%s399] %v408
                %v410 = vld [vmem:[%s406 + $0x4] sm:%s399]
                %411 = vst [vmem:[%s407 + $0x1] sm:%s399] %v410
                %v412 = vld [vmem:[%s406 + $0x8] sm:%s399]
                %413 = vst [vmem:[%s407 + $0x2] sm:%s399] %v412
              $region98: #{tpu_custom_call.1} parent=92 // loop_footer
                %s405 = sadd.s32 1, %s401
              $region99: #{tpu_custom_call.1} parent=92 // loop_footer_branch
                %400 = sbr.rel target = $region95
              $region100: #{tpu_custom_call.1} parent=92 // loop_exit
                _
            $region93: #{tpu_custom_call.1} parent=84 // pred_fallthru
              _
          $region85: #{tpu_custom_call.1} parent=80 // pred_fallthru
            _
          %432 = vnop
        $region81: #{tpu_custom_call.1} parent=27 // pred_fallthru
          _
        // Predicated region
        $region112: #{tpu_custom_call.1} parent=27 // pred_check
          %p433 = pneg %p153
        $region113: #{tpu_custom_call.1} parent=27 // pred_check_branch
          %435 = sbr.rel (%p433) target = $region115
        $region114: #{tpu_custom_call.1} parent=27 // pred_region
          %p436 = scmp.lt.s32.totalorder %s25, 3
          %s437 = scalar_select %p436, %s25, 3
          %s438 = smul.addr %s437, 4
          %s439 = scalar_lea.vmem %s4, %s438
        $region115: #{tpu_custom_call.1} parent=27 // pred_fallthru
          _
      $region28: #{tpu_custom_call.1} parent=5 // pred_fallthru
        _
      %p440 = scmp.le.s32.totalorder 1, %s17
      %p441 = scmp.lt.s32.totalorder %s17, 9
      %p442 = pnand %p440, %p441
      %p443 = pneg %p442
      // Predicated region
      $region116: #{tpu_custom_call.1} parent=5 // pred_check
        _
      $region117: #{tpu_custom_call.1} parent=5 // pred_check_branch
        %445 = sbr.rel (%p442) target = $region119
      $region118: #{tpu_custom_call.1} parent=5 // pred_region
        %s446 = ssub.s32 %s17, 1
        %s447 = sand.u32 %s94, 1
        %s448 = sand.u32 %s94, 1
        %s449 = smul.addr %s448, 48
        %s450 = scalar_lea.vmem [#allocation3], %s449
        // Predicated region
        $region120: #{tpu_custom_call.1} parent=118 // pred_check
          %p451 = pneg %p107
        $region121: #{tpu_custom_call.1} parent=118 // pred_check_branch
          %453 = sbr.rel (%p451) target = $region123
        $region122: #{tpu_custom_call.1} parent=118 // pred_region
          _
        $region123: #{tpu_custom_call.1} parent=118 // pred_fallthru
          _
        %s454 = sand.u32 %s120, 1
        %s455 = sand.u32 %s120, 1
        %s456 = smul.addr %s455, 3
        %s457 = scalar_lea.vmem [#allocation4], %s456
        // Predicated region
        $region124: #{tpu_custom_call.1} parent=118 // pred_check
          %p458 = pneg %p133
        $region125: #{tpu_custom_call.1} parent=118 // pred_check_branch
          %460 = sbr.rel (%p458) target = $region127
        $region126: #{tpu_custom_call.1} parent=118 // pred_region
          _
        $region127: #{tpu_custom_call.1} parent=118 // pred_fallthru
          _
        %p461 = scmp.lt.s32.totalorder %s26, 1
        %s462 = scalar_select %p461, %s26, 1
        %s463 = smul.addr %s462, 8
        %s464 = scalar_lea.vmem %s0, %s463
        %p465 = pneg %p55
        %p466 = pneg %p52
        %p467 = scmp.lt.s32.totalorder %s26, 1
        %s468 = scalar_select %p467, %s26, 1
        %s469 = scalar_lea.vmem %s1, %s468
        %p470 = pneg %p81
        %p471 = pneg %p78
        %s472 = sand.u32 %s94, 1
        %s473 = sand.u32 %s94, 1
        %s474 = smul.addr %s473, 48
        %s475 = scalar_lea.vmem [#allocation3], %s474
        %p476 = pneg %p107
        %p477 = pneg %p104
        %s478 = sand.u32 %s120, 1
        %s479 = sand.u32 %s120, 1
        %s480 = smul.addr %s479, 3
        %s481 = scalar_lea.vmem [#allocation4], %s480
        %p482 = pneg %p133
        %p483 = pneg %p130
        %p484 = scmp.lt.s32.totalorder %s27, 3
        %s485 = scalar_select %p484, %s27, 3
        %s486 = smul.addr %s485, 4
        %s487 = scalar_lea.vmem %s4, %s486
        %p488 = pneg %p159
        %p489 = pneg %p156
        %p490 = pneg %p180
        %p491 = pneg %p177
        %p492 = pneg %p201
        %p493 = pneg %p198
        %p494 = pneg %p222
        %p495 = pneg %p219
        %p496 = pneg %p248
        %p497 = pneg %p245
        %s498 = sand.u32 %s235, 1
        %s499 = scalar_lea.sflag [#allocation6], %s498
        %s500 = sand.u32 %s235, 1
        %s501 = smul.addr %s500, 8
        %s502 = scalar_lea.vmem [#allocation5], %s501
        %p503 = scmp.lt.s32.totalorder %s26, 1
        %s504 = scalar_select %p503, %s26, 1
        %s505 = smul.addr %s504, 8
        %s506 = scalar_lea.vmem %s0, %s505
        %p507 = scmp.lt.s32.totalorder %s26, 1
        %s508 = scalar_select %p507, %s26, 1
        %s509 = scalar_lea.vmem %s1, %s508
        %p510 = scmp.lt.s32.totalorder %s27, 3
        %s511 = scalar_select %p510, %s27, 3
        %s512 = smul.addr %s511, 4
        %s513 = scalar_lea.vmem %s4, %s512
        %p515 = scmp.eq.s32.totalorder %s27, 0
        // Predicated region
        $region128: #{tpu_custom_call.1} parent=118 // pred_check
          %p516 = pneg %p515
        $region129: #{tpu_custom_call.1} parent=118 // pred_check_branch
          %518 = sbr.rel (%p516) target = $region131
        $region130: #{tpu_custom_call.1} parent=118 // pred_region
          %vm519 = vcmask 261120
          %520 = vst.msk [vmem:[#allocation2] sm:$0xff] %vm519, 0.0
        $region131: #{tpu_custom_call.1} parent=118 // pred_fallthru
          _
        %v521 = vld [vmem:[%s506] sm:$0xff]
        %v522 = vpack.c.bf16 %v521, %v521
        %v523 = vld [vmem:[%s450] sm:$0xf]
        %v524 = vld [vmem:[%s450 + $0x4] sm:$0xf]
        %v525 = vld [vmem:[%s450 + $0x8] sm:$0xf]
        %v526 = vld [vmem:[%s450 + $0xc] sm:$0xf]
        %v527 = vld [vmem:[%s457] sm:$0x1]
        %v529 = vperm.slane %v527, 0
        %v535 = vunpack.c.l.b16 %v523
        %v536 = vunpack.c.l.b16 %v524
        %v537 = vunpack.c.l.b16 %v525
        %v538 = vunpack.c.l.b16 %v526
        %v539 = vpack.c.b16 %v536, %v535
        %v540 = vpack.c.b16 %v538, %v537
        %vm543 = vcmask 261120
        %v545 = vsel %vm543, %v522, 0
        %547 = vmatpush.bf16.msra.mxu0 0
        %548 = vmatpush.bf16.msra.mxu0 0
        %549 = vmatpush.bf16.msra.mxu0 0
        %550 = vmatpush.bf16.msra.mxu0 0
        %551 = vmatpush.bf16.msra.mxu0 0
        %552 = vmatpush.bf16.msra.mxu0 0
        %553 = vmatpush.bf16.msra.mxu0 %v540
        %554 = vmatpush.bf16.msra.mxu0 %v539
        %555 = vmatmul.bf16.gmra.mxu0 %v545
        %v556 = vpop.f32.mrf.mxu0
        %v557 = vadd.f32 %v529, %v556
        %v558 = vpop.f32.mrf.mxu0
        %559 = vdwg.mxu0
        %s560 = scalar_lea.vmem %s450, 16 [#allocation3]
        %v561 = vld [vmem:[%s560] sm:$0xf]
        %v562 = vld [vmem:[%s560 + $0x4] sm:$0xf]
        %v563 = vld [vmem:[%s560 + $0x8] sm:$0xf]
        %v564 = vld [vmem:[%s560 + $0xc] sm:$0xf]
        %s565 = scalar_lea.vmem %s457, 1 [#allocation4]
        %v566 = vld [vmem:[%s565] sm:$0x1]
        %v568 = vperm.slane %v566, 0
        %v574 = vunpack.c.l.b16 %v561
        %v575 = vunpack.c.l.b16 %v562
        %v576 = vunpack.c.l.b16 %v563
        %v577 = vunpack.c.l.b16 %v564
        %v578 = vpack.c.b16 %v575, %v574
        %v579 = vpack.c.b16 %v577, %v576
        %582 = vmatpush.bf16.msra.mxu0 0
        %583 = vmatpush.bf16.msra.mxu0 0
        %584 = vmatpush.bf16.msra.mxu0 0
        %585 = vmatpush.bf16.msra.mxu0 0
        %586 = vmatpush.bf16.msra.mxu0 0
        %587 = vmatpush.bf16.msra.mxu0 0
        %588 = vmatpush.bf16.msra.mxu0 %v579
        %589 = vmatpush.bf16.msra.mxu0 %v578
        %590 = vmatmul.bf16.gmra.mxu0 %v545
        %v591 = vpop.f32.mrf.mxu0
        %v592 = vadd.f32 %v568, %v591
        %v593 = vpop.f32.mrf.mxu0
        %594 = vdwg.mxu0
        %s595 = scalar_lea.vmem %s450, 32 [#allocation3]
        %v596 = vld [vmem:[%s595] sm:$0xf]
        %v597 = vld [vmem:[%s595 + $0x4] sm:$0xf]
        %v598 = vld [vmem:[%s595 + $0x8] sm:$0xf]
        %v599 = vld [vmem:[%s595 + $0xc] sm:$0xf]
        %s600 = scalar_lea.vmem %s457, 2 [#allocation4]
        %v601 = vld [vmem:[%s600] sm:$0x1]
        %v603 = vperm.slane %v601, 0
        %v609 = vunpack.c.l.b16 %v596
        %v610 = vunpack.c.l.b16 %v597
        %v611 = vunpack.c.l.b16 %v598
        %v612 = vunpack.c.l.b16 %v599
        %v613 = vpack.c.b16 %v610, %v609
        %v614 = vpack.c.b16 %v612, %v611
        %617 = vmatpush.bf16.msra.mxu0 0
        %618 = vmatpush.bf16.msra.mxu0 0
        %619 = vmatpush.bf16.msra.mxu0 0
        %620 = vmatpush.bf16.msra.mxu0 0
        %621 = vmatpush.bf16.msra.mxu0 0
        %622 = vmatpush.bf16.msra.mxu0 0
        %623 = vmatpush.bf16.msra.mxu0 %v614
        %624 = vmatpush.bf16.msra.mxu0 %v613
        %625 = vmatmul.bf16.gmra.mxu0 %v545
        %v626 = vpop.f32.mrf.mxu0
        %v627 = vadd.f32 %v603, %v626
        %v628 = vpop.f32.mrf.mxu0
        %629 = vdwg.mxu0
        %v630 = vpack.c.bf16 %v557, %v557
        %v631 = vpack.c.bf16 %v592, %v592
        %v632 = vld [vmem:[%s509] sm:$0x1]
        %v634 = vperm.slane %v632, 0
        %vm636 = vcmask 64512
        %v638 = vsel %vm636, %v630, 0
        %v641 = vsel %vm636, %v631, 0
        %643 = vmatpush.bf16.xpose.msra.mxu0 0
        %644 = vmatpush.bf16.xpose.msra.mxu0 0
        %645 = vmatpush.bf16.xpose.msra.mxu0 0
        %646 = vmatpush.bf16.xpose.msra.mxu0 0
        %647 = vmatpush.bf16.xpose.msra.mxu0 0
        %648 = vmatpush.bf16.xpose.msra.mxu0 0
        %649 = vmatpush.bf16.xpose.msra.mxu0 0
        %650 = vmatpush.bf16.xpose.msra.mxu0 %v641
        %651 = vmatmul.bf16.gmra.mxu0 %v638
        %v652 = vpop.f32.mrf.mxu0
        %v653 = vadd.f32 %v634, %v652
        %v654 = vpop.f32.mrf.mxu0
        %655 = vdwg.mxu0
        %v656 = vsel %vm636, %v653, -inf
        %657 = vmax.xlane.f32.xlu0 %v656
        %v658 = vpop.xlane.xlu0 %657
        %v659 = vsub.f32 %v653, %v658
        %v660 = vmul.f32 %v659, 1.442695
        %v661 = vpow.pop %v660
        %v662 = vsel %vm636, %v661, 0.0
        %663 = vadd.xlane.f32.xlu0 %v662
        %v664 = vpop.xlane.xlu0 %663
        %v665 = vrcp.pop %v664
        %v666 = vmul.f32 %v661, %v665
        %v667 = vpack.c.bf16 %v666, %v666
        %v668 = vpack.c.bf16 %v627, %v627
        %v670 = vsel %vm636, %v667, 0
        %vm672 = vcmask 1043456
        %v674 = vsel %vm672, %v668, 0
        %676 = vmatpush.bf16.msra.mxu0 0
        %677 = vmatpush.bf16.msra.mxu0 0
        %678 = vmatpush.bf16.msra.mxu0 0
        %679 = vmatpush.bf16.msra.mxu0 0
        %680 = vmatpush.bf16.msra.mxu0 0
        %681 = vmatpush.bf16.msra.mxu0 0
        %682 = vmatpush.bf16.msra.mxu0 0
        %683 = vmatpush.bf16.msra.mxu0 %v674
        %684 = vmatmul.bf16.gmra.mxu0 %v670
        %v685 = vpop.f32.mrf.mxu0
        %v686 = vadd.f32 0.0, %v685
        %v687 = vpop.f32.mrf.mxu0
        %688 = vdwg.mxu0
        %v689 = vld [vmem:[#allocation2] sm:$0xff]
        %v690 = vpack.c.bf16 %v686, %v686
        %v691 = vld [vmem:[%s513] sm:$0xf]
        %v693 = vsel %vm636, %v690, 0
        %v696 = vsel %vm672, %v691, 0
        %698 = vmatpush.bf16.msra.mxu0 0
        %699 = vmatpush.bf16.msra.mxu0 0
        %700 = vmatpush.bf16.msra.mxu0 0
        %701 = vmatpush.bf16.msra.mxu0 0
        %702 = vmatpush.bf16.msra.mxu0 0
        %703 = vmatpush.bf16.msra.mxu0 0
        %704 = vmatpush.bf16.msra.mxu0 0
        %705 = vmatpush.bf16.msra.mxu0 %v696
        %706 = vmatmul.bf16.gmra.mxu0 %v693
        %v707 = vpop.f32.mrf.mxu0
        %v708 = vadd.f32 0.0, %v707
        %v709 = vpop.f32.mrf.mxu0
        %710 = vdwg.mxu0
        %v711 = vadd.f32 %v689, %v708
        %712 = vst.msk [vmem:[#allocation2] sm:$0xff] %vm543, %v711
        %p713 = scmp.eq.s32.totalorder %s27, 3
        // Predicated region
        $region132: #{tpu_custom_call.1} parent=118 // pred_check
          %p714 = pneg %p713
        $region133: #{tpu_custom_call.1} parent=118 // pred_check_branch
          %716 = sbr.rel (%p714) target = $region135
        $region134: #{tpu_custom_call.1} parent=118 // pred_region
          %v717 = vld [vmem:[#allocation2] sm:$0xff]
          %v718 = vld [vmem:[%s5] sm:$0x1]
          %v720 = vperm.slane %v718, 0
          %v722 = vadd.f32 %v717, %v720
          %v723 = vadd.f32 %v722, %v521
          %v724 = vsel %vm543, %v723, 0.0
          %725 = vadd.xlane.f32.xlu0 %v724
          %v726 = vpop.xlane.xlu0 %725
          %v727 = vrcp.pop 32.0
          %v728 = vmul.f32 32.0, %v727
          %v729 = vsub.f32 1.0, %v728
          %v730 = vmul.f32 %v727, %v729
          %v731 = vadd.f32 %v727, %v730
          %vm732 = vweird.f32 %v727
          %v733 = vsel %vm732, %v727, %v731
          %v734 = vmul.f32 %v726, %v733
          %v735 = vsub.f32 %v723, %v734
          %v736 = vmul.f32 %v735, %v735
          %v737 = vsel %vm543, %v736, 0.0
          %738 = vadd.xlane.f32.xlu0 %v737
          %v739 = vpop.xlane.xlu0 %738
          %v740 = vmul.f32 %v739, %v733
          %v741 = vadd.f32 %v740, 1e-05
          %v742 = vrsqrt.pop %v741
          %v743 = vmul.f32 %v742, %v741
          %v744 = vmul.f32 %v743, %v742
          %v745 = vmul.f32 0.5, %v744
          %v746 = vsub.f32 1.5, %v745
          %v747 = vmul.f32 %v742, %v746
          %vm748 = vweird.f32 %v741
          %vm749 = vweird.f32 %v742
          %vm750 = vmor %vm748, %vm749
          %v751 = vsel %vm750, %v742, %v747
          %v752 = vmul.f32 %v735, %v751
          %v753 = vld [vmem:[%s6] sm:$0x1]
          %v755 = vperm.slane %v753, 0
          %v757 = vmul.f32 %v755, %v752
          %v758 = vld [vmem:[%s7] sm:$0x1]
          %v760 = vperm.slane %v758, 0
          %v762 = vadd.f32 %v757, %v760
          %763 = vst.msk [vmem:[%s502] sm:$0xff] %vm543, %v762
        $region135: #{tpu_custom_call.1} parent=118 // pred_fallthru
          _
        %s764 = sand.u32 %s235, 1
        %s765 = scalar_lea.sflag [#allocation6], %s764
        %s766 = sand.u32 %s235, 1
        %s767 = smul.addr %s766, 8
        %s768 = scalar_lea.vmem [#allocation5], %s767
        // Predicated region
        $region136: #{tpu_custom_call.1} parent=118 // pred_check
          %p769 = pneg %p245
        $region137: #{tpu_custom_call.1} parent=118 // pred_check_branch
          %771 = sbr.rel (%p769) target = $region139
        $region138: #{tpu_custom_call.1} parent=118 // pred_region
          %773 = vsyncadd %s765, 0
          %s774 = smul.addr %s26, 8
          %s775 = scalar_lea.hbm %s8, %s774
          %s777 = sshll.u32 %s768, 4
          %s778 = int_to_ptr.vmem [resolvable:$true] %s777
          %s779 = sshll.u32 %s775, 4
          %s780 = int_to_ptr.hbm [resolvable:$true] %s779
          %782 = dma.vmem_to_hbm [thread:$0]  %s778, 128, %s780, %s765
        $region139: #{tpu_custom_call.1} parent=118 // pred_fallthru
          _
      $region119: #{tpu_custom_call.1} parent=5 // pred_fallthru
        _
      %p783 = scmp.le.s32.totalorder 2, %s17
      // Predicated region
      $region140: #{tpu_custom_call.1} parent=5 // pred_check
        %p784 = pneg %p783
      $region141: #{tpu_custom_call.1} parent=5 // pred_check_branch
        %786 = sbr.rel (%p784) target = $region143
      $region142: #{tpu_custom_call.1} parent=5 // pred_region
        %s787 = ssub.s32 %s17, 2
        // Predicated region
        $region144: #{tpu_custom_call.1} parent=142 // pred_check
          %p788 = pneg %p251
        $region145: #{tpu_custom_call.1} parent=142 // pred_check_branch
          %790 = sbr.rel (%p788) target = $region147
        $region146: #{tpu_custom_call.1} parent=142 // pred_region
          %s791 = sand.u32 %s236, 1
          %s792 = scalar_lea.sflag [#allocation6], %s791
          %s793 = sand.u32 %s236, 1
          %s794 = smul.addr %s793, 8
          %s795 = scalar_lea.vmem [#allocation5], %s794
          %797 = dma.done %s792, 128
        $region147: #{tpu_custom_call.1} parent=142 // pred_fallthru
          _
      $region143: #{tpu_custom_call.1} parent=5 // pred_fallthru
        _
    $region6: #{tpu_custom_call.1} parent=1 // loop_footer
      %s21 = sadd.s32 1, %s17
    $region7: #{tpu_custom_call.1} parent=1 // loop_footer_branch
      %16 = sbr.rel target = $region3
    $region8: #{tpu_custom_call.1} parent=1 // loop_exit
      _
    %798 = vsyncpa [#allocation6], 1
    %s799 = scalar_lea.sflag [#allocation6], 1
    %800 = vsyncpa %s799, 1

</llo_original>
